<compile_context>
chip_gen: v5e
topology: v5e:2x2
jax: 0.10.0
libtpu: 0.0.40
codegen_flags: <defaults>
</compile_context>

<pallas_src>
import functools

import jax
import jax.numpy as jnp
from jax import lax
from jax.experimental import pallas as pl
from jax.experimental.pallas import tpu as pltpu  # noqa: F401  (TPU backend)


def _mixed_op_kernel(xflat_ref,   # VMEM (N*C, (H+3)*Wp)  padded, flattened images
                     wbig_ref,    # VMEM (N*C, 10*N*C)    folded block-diag weights
                     o_ref,       # VMEM (N*C, L)         L = H*Wp, multiple of 128
                     *, L, Wp):
    xf = xflat_ref[...]                               # one load of the whole stack
    nc = xf.shape[0]                                  # = N*C (8 here)

    # im2col: tap (dy,dx) is a static lane-axis shift of the flattened padded
    # image; each tap block is (N*C, L) -> 8-sublane aligned, lane dim 3*128.
    taps = [xf[:, dy * Wp + dx: dy * Wp + dx + L]
            for dy in range(3) for dx in range(3)]
    # Bias folded into the matmul: trailing all-ones block (only its first
    # row is actually weighted; the rest multiply zero columns of wbig).
    taps.append(jnp.ones((nc, L), dtype=jnp.float32))
    patches = jnp.concatenate(taps, axis=0)           # (10*N*C, L)

    # Entire mixed op (all 5 candidates + bias, both images) == one matmul.
    o_ref[...] = jnp.dot(wbig_ref[...], patches,
                         preferred_element_type=jnp.float32).astype(o_ref.dtype)


@jax.jit
def mixed_operation(x_nchw, alpha_e, w3, b3, w1, b1):
    """Weighted sum of candidate ops, fused into one conv-as-GEMM Pallas kernel.

    Prob index -> op mapping follows sorted(operations.keys()):
      probs[0]=avg_pool_3x3, [1]=conv_1x1, [2]=conv_3x3, [3]=skip_connect, [4]=zero.
    A different operation set would silently break this mapping.
    """
    x = x_nchw.astype(jnp.float32)
    N, C, H, W = x.shape

    # Lane-padded row width: smallest Wp >= W+2 such that L = H*Wp is a
    # multiple of 128 (lane-dense output; unmasked stores).
    Wp = W + 2
    while (H * Wp) % 128 != 0:
        Wp += 1
    L = H * Wp
    # Last tap (dy=2,dx=2) reads up to flat index 2*Wp+2+L-1; the (1,2) row pad
    # guarantees (H+3)*Wp >= 2*Wp + 2 + L.  (VMEM has no runtime bounds check.)
    assert (H + 3) * Wp >= 2 * Wp + 2 + L

    probs = jax.nn.softmax(alpha_e, axis=-1).astype(jnp.float32)     # (5,)

    # ---- fold all five ops into a single 3x3 conv (HWIO taps) ---------------
    eye = jnp.eye(C, dtype=jnp.float32)
    wfold = probs[2] * w3.astype(jnp.float32) + (probs[0] / 9.0) * eye[None, None]
    wfold = wfold.at[1, 1].add(probs[1] * w1.astype(jnp.float32) + probs[3] * eye)
    bfold = (probs[2] * b3 + probs[1] * b1).astype(jnp.float32)       # (C,)

    # ---- build the block-diagonal-over-N GEMM weights ------------------------
    # Tap t contributes W[n*C+co, t*(N*C) + n*C+ci] = wfold[dy,dx,ci,co].
    eyeN = jnp.eye(N, dtype=jnp.float32)
    tap_oi = jnp.transpose(wfold, (0, 1, 3, 2)).reshape(9, C, C)      # (tap, co, ci)
    blocks = jnp.einsum('ab,tij->taibj', eyeN, tap_oi).reshape(9, N * C, N * C)
    tap_cols = jnp.transpose(blocks, (1, 0, 2)).reshape(N * C, 9 * N * C)
    # Bias block: only column 0 is used (it multiplies the ones row).
    bias_block = jnp.zeros((N * C, N * C), jnp.float32).at[:, 0].set(
        jnp.tile(bfold, N))
    wbig = jnp.concatenate([tap_cols, bias_block], axis=1)            # (N*C, 10*N*C)

    # ---- channels/batch-first, spatially flattened padded input -------------
    # Single pad (top 1 / bottom 2 rows, left 1 / right Wp-W-1 cols) + single
    # reshape; bottom rows & extra right cols are zeros that only feed the
    # junk output columns dropped at the end.
    x_pad = jnp.pad(x, ((0, 0), (0, 0), (1, 2), (1, Wp - W - 1)))     # (N,C,H+3,Wp)
    xflat = x_pad.reshape(N * C, (H + 3) * Wp)                        # (N*C, flat)

    out_flat = pl.pallas_call(
        functools.partial(_mixed_op_kernel, L=L, Wp=Wp),
        out_shape=jax.ShapeDtypeStruct((N * C, L), jnp.float32),
        # No grid: single invocation, whole (tiny) arrays live in VMEM.
    )(xflat, wbig)

    # (N*C, H*Wp) -> (N, C, H, Wp) -> drop the Wp-W junk columns per row.
    return out_flat.reshape(N, C, H, Wp)[..., :W]


def _reference(x_nchw, alpha_e, w3, b3, w1, b1):
    """Pure-JAX reference (independent of the folding / flattening tricks)."""
    x = jnp.transpose(x_nchw, (0, 2, 3, 1)).astype(jnp.float32)       # NHWC
    probs = jax.nn.softmax(alpha_e, axis=-1)

    dn = ('NHWC', 'HWIO', 'NHWC')
    conv3 = lax.conv_general_dilated(x, w3, (1, 1), 'SAME', dimension_numbers=dn,
                                     precision=lax.Precision.HIGHEST) + b3
    conv1 = lax.conv_general_dilated(x, w1.reshape(1, 1, *w1.shape), (1, 1),
                                     'SAME', dimension_numbers=dn,
                                     precision=lax.Precision.HIGHEST) + b1
    pool = lax.reduce_window(x, 0.0, lax.add, (1, 3, 3, 1), (1, 1, 1, 1),
                             ((0, 0), (1, 1), (1, 1), (0, 0))) / 9.0
    skip = x
    zero = jnp.zeros_like(x)
    mixed = (probs[0] * pool + probs[1] * conv1 + probs[2] * conv3
             + probs[3] * skip + probs[4] * zero)
    return jnp.transpose(mixed, (0, 3, 1, 2))


if __name__ == "__main__":
    key = jax.random.PRNGKey(0)
    k_x, k_a, k_w3, k_b3, k_w1, k_b1 = jax.random.split(key, 6)

    N, C, H, W = 2, 4, 16, 16
    NUM_OPS = 5

    x = jax.random.normal(k_x, (N, C, H, W), jnp.float32)             # NCHW input
    alpha_e = jax.random.normal(k_a, (NUM_OPS,), jnp.float32)         # alpha_e[0]
    w3 = jax.random.normal(k_w3, (3, 3, C, C), jnp.float32) * 0.1     # HWIO
    b3 = jax.random.normal(k_b3, (C,), jnp.float32) * 0.1
    w1 = jax.random.normal(k_w1, (C, C), jnp.float32) * 0.1           # IO
    b1 = jax.random.normal(k_b1, (C,), jnp.float32) * 0.1

    out = mixed_operation(x, alpha_e, w3, b3, w1, b1)
    out = jax.block_until_ready(out)

    ref = _reference(x, alpha_e, w3, b3, w1, b1)
    assert out.shape == (N, C, H, W)
    assert jnp.allclose(out, ref, atol=1e-4, rtol=1e-4), \
        f"max abs err {jnp.max(jnp.abs(out - ref))}"

    # TODO(synk): the `len(self.ops) == 1` branch (one op reused with several
    # op_num variants) is not modeled; only the standard multi-op mixing path is.
    print("KERNEL_OK")
</pallas_src>

<mosaic_0001>
module attributes {stable_mosaic.version = 11 : i64} {
  func.func @_mixed_op_kernel(%arg0: memref<8x456xf32, #tpu.memory_space<vmem>>, %arg1: memref<8x80xf32, #tpu.memory_space<vmem>>, %arg2: memref<8x384xf32, #tpu.memory_space<vmem>>) attributes {dimension_semantics = [], scalar_prefetch = 0 : i64, scratch_operands = 0 : i64, tpu.core_type = #tpu.core_type<tc>} {
    %c0 = arith.constant 0 : index
    %c0_0 = arith.constant 0 : index
    %0 = vector.load %arg0[%c0, %c0_0] : memref<8x456xf32, #tpu.memory_space<vmem>>, vector<8x456xf32>
    %1 = vector.extract_strided_slice %0 {offsets = [0, 0], sizes = [8, 384], strides = [1, 1]} : vector<8x456xf32> to vector<8x384xf32>
    %2 = vector.extract_strided_slice %0 {offsets = [0, 1], sizes = [8, 384], strides = [1, 1]} : vector<8x456xf32> to vector<8x384xf32>
    %3 = vector.extract_strided_slice %0 {offsets = [0, 2], sizes = [8, 384], strides = [1, 1]} : vector<8x456xf32> to vector<8x384xf32>
    %4 = vector.extract_strided_slice %0 {offsets = [0, 24], sizes = [8, 384], strides = [1, 1]} : vector<8x456xf32> to vector<8x384xf32>
    %5 = vector.extract_strided_slice %0 {offsets = [0, 25], sizes = [8, 384], strides = [1, 1]} : vector<8x456xf32> to vector<8x384xf32>
    %6 = vector.extract_strided_slice %0 {offsets = [0, 26], sizes = [8, 384], strides = [1, 1]} : vector<8x456xf32> to vector<8x384xf32>
    %7 = vector.extract_strided_slice %0 {offsets = [0, 48], sizes = [8, 384], strides = [1, 1]} : vector<8x456xf32> to vector<8x384xf32>
    %8 = vector.extract_strided_slice %0 {offsets = [0, 49], sizes = [8, 384], strides = [1, 1]} : vector<8x456xf32> to vector<8x384xf32>
    %9 = vector.extract_strided_slice %0 {offsets = [0, 50], sizes = [8, 384], strides = [1, 1]} : vector<8x456xf32> to vector<8x384xf32>
    %cst = arith.constant 1.000000e+00 : f32
    %10 = vector.broadcast %cst : f32 to vector<8x384xf32>
    %11 = tpu.concatenate %1, %2, %3, %4, %5, %6, %7, %8, %9, %10 in 0 : vector<8x384xf32>, vector<8x384xf32>, vector<8x384xf32>, vector<8x384xf32>, vector<8x384xf32>, vector<8x384xf32>, vector<8x384xf32>, vector<8x384xf32>, vector<8x384xf32>, vector<8x384xf32> -> vector<80x384xf32>
    %c0_1 = arith.constant 0 : index
    %c0_2 = arith.constant 0 : index
    %12 = vector.load %arg1[%c0_1, %c0_2] : memref<8x80xf32, #tpu.memory_space<vmem>>, vector<8x80xf32>
    %cst_3 = arith.constant dense<0.000000e+00> : vector<8x384xf32>
    %13 = tpu.matmul %12, %11, %cst_3 {dimension_numbers = #tpu.dot_dimension_numbers<[1], [0], [0], [1], [0, 0, 1, 1], [], []>} : vector<8x80xf32>, vector<80x384xf32>, vector<8x384xf32> -> vector<8x384xf32>
    %c0_4 = arith.constant 0 : index
    %c0_5 = arith.constant 0 : index
    %14 = vector.load %arg2[%c0_4, %c0_5] : memref<8x384xf32, #tpu.memory_space<vmem>>, vector<8x384xf32>
    tpu.vector_store %arg2[%c0_4, %c0_5], %13 {strides = array<i32>} : memref<8x384xf32, #tpu.memory_space<vmem>>, vector<8x384xf32>,
    return
  }
}

</mosaic_0001>

<llo_original>
// kernel: mixed_operation.1
$region0: #{mixed_operation.1}
  #allocation0 [shape = 'u32[]', space=smem, size = 0x4, offset = 0x4, fixed_abs, tag = 'smem constant byte address 0x4 - core index']
  #allocation1 [shape = 'u32[72,128]{1,0:T(1,128)}', space=vmem, size = 0x9000, scoped, tag = 'internal scratch']
  %s0 = inlined_call_operand.vmem [shape: f32[8,456], index: 0, kind: input, shape index: {}]
  %s1 = inlined_call_operand.vmem [shape: f32[8,80], index: 1, kind: input, shape index: {}]
  %s2 = inlined_call_operand.vmem [shape: f32[8,384], index: 2, kind: output, shape index: {}]
  %s3 = sld [smem:[#allocation0]]
  $region18: #{mixed_operation.1} parent=0
    _
  %s5 = ssub.s32 1, %s3
  %s6 = scalar_select 0, %s5, %s3
  // Predicated region
  $region2: #{mixed_operation.1} parent=0 // pred_check
    _
  $region3: #{mixed_operation.1} parent=0 // pred_check_branch
    %8 = sbr.rel (0) target = $region5
  $region4: #{mixed_operation.1} parent=0 // pred_region
    _
  $region5: #{mixed_operation.1} parent=0 // pred_fallthru
    _
  // Predicated region
  $region6: #{mixed_operation.1} parent=0 // pred_check
    _
  $region7: #{mixed_operation.1} parent=0 // pred_check_branch
    %10 = sbr.rel (0) target = $region9
  $region8: #{mixed_operation.1} parent=0 // pred_region
    _
  $region9: #{mixed_operation.1} parent=0 // pred_fallthru
    _
  %v11 = vld [vmem:[%s0] sm:$0xff]
  %v12 = vld [vmem:[%s0 + $0x8] sm:$0xff]
  %v13 = vld [vmem:[%s0 + $0x10] sm:$0xff]
  %v14 = vld [vmem:[%s0 + $0x18] sm:$0xff]
  %19 = vrot.lane.b32.xlu0 %v11, 127
  %v20 = vpop.permute.xlu0 %19
  %21 = vrot.lane.b32.xlu0 %v12, 127
  %v22 = vpop.permute.xlu0 %21
  %23 = vrot.lane.b32.xlu0 %v13, 127
  %v24 = vpop.permute.xlu0 %23
  %25 = vrot.lane.b32.xlu0 %v14, 127
  %v26 = vpop.permute.xlu0 %25
  %vm27 = vcmask 1039360
  %v28 = vsel %vm27, %v20, %v22
  %v29 = vsel %vm27, %v22, %v24
  %v30 = vsel %vm27, %v24, %v26
  %34 = vrot.lane.b32.xlu0 %v11, 126
  %v35 = vpop.permute.xlu0 %34
  %36 = vrot.lane.b32.xlu0 %v12, 126
  %v37 = vpop.permute.xlu0 %36
  %38 = vrot.lane.b32.xlu0 %v13, 126
  %v39 = vpop.permute.xlu0 %38
  %40 = vrot.lane.b32.xlu0 %v14, 126
  %v41 = vpop.permute.xlu0 %40
  %vm42 = vcmask 1031168
  %v43 = vsel %vm42, %v35, %v37
  %v44 = vsel %vm42, %v37, %v39
  %v45 = vsel %vm42, %v39, %v41
  %49 = vrot.lane.b32.xlu0 %v11, 104
  %v50 = vpop.permute.xlu0 %49
  %51 = vrot.lane.b32.xlu0 %v12, 104
  %v52 = vpop.permute.xlu0 %51
  %53 = vrot.lane.b32.xlu0 %v13, 104
  %v54 = vpop.permute.xlu0 %53
  %55 = vrot.lane.b32.xlu0 %v14, 104
  %v56 = vpop.permute.xlu0 %55
  %vm57 = vcmask 850944
  %v58 = vsel %vm57, %v50, %v52
  %v59 = vsel %vm57, %v52, %v54
  %v60 = vsel %vm57, %v54, %v56
  %64 = vrot.lane.b32.xlu0 %v11, 103
  %v65 = vpop.permute.xlu0 %64
  %66 = vrot.lane.b32.xlu0 %v12, 103
  %v67 = vpop.permute.xlu0 %66
  %68 = vrot.lane.b32.xlu0 %v13, 103
  %v69 = vpop.permute.xlu0 %68
  %70 = vrot.lane.b32.xlu0 %v14, 103
  %v71 = vpop.permute.xlu0 %70
  %vm72 = vcmask 842752
  %v73 = vsel %vm72, %v65, %v67
  %v74 = vsel %vm72, %v67, %v69
  %v75 = vsel %vm72, %v69, %v71
  %79 = vrot.lane.b32.xlu0 %v11, 102
  %v80 = vpop.permute.xlu0 %79
  %81 = vrot.lane.b32.xlu0 %v12, 102
  %v82 = vpop.permute.xlu0 %81
  %83 = vrot.lane.b32.xlu0 %v13, 102
  %v84 = vpop.permute.xlu0 %83
  %85 = vrot.lane.b32.xlu0 %v14, 102
  %v86 = vpop.permute.xlu0 %85
  %vm87 = vcmask 834560
  %v88 = vsel %vm87, %v80, %v82
  %v89 = vsel %vm87, %v82, %v84
  %v90 = vsel %vm87, %v84, %v86
  %94 = vrot.lane.b32.xlu0 %v11, 80
  %v95 = vpop.permute.xlu0 %94
  %96 = vrot.lane.b32.xlu0 %v12, 80
  %v97 = vpop.permute.xlu0 %96
  %98 = vrot.lane.b32.xlu0 %v13, 80
  %v99 = vpop.permute.xlu0 %98
  %100 = vrot.lane.b32.xlu0 %v14, 80
  %v101 = vpop.permute.xlu0 %100
  %vm102 = vcmask 654336
  %v103 = vsel %vm102, %v95, %v97
  %v104 = vsel %vm102, %v97, %v99
  %v105 = vsel %vm102, %v99, %v101
  %109 = vrot.lane.b32.xlu0 %v11, 79
  %v110 = vpop.permute.xlu0 %109
  %111 = vrot.lane.b32.xlu0 %v12, 79
  %v112 = vpop.permute.xlu0 %111
  %113 = vrot.lane.b32.xlu0 %v13, 79
  %v114 = vpop.permute.xlu0 %113
  %115 = vrot.lane.b32.xlu0 %v14, 79
  %v116 = vpop.permute.xlu0 %115
  %vm117 = vcmask 646144
  %v118 = vsel %vm117, %v110, %v112
  %v119 = vsel %vm117, %v112, %v114
  %v120 = vsel %vm117, %v114, %v116
  %124 = vrot.lane.b32.xlu0 %v11, 78
  %v125 = vpop.permute.xlu0 %124
  %126 = vrot.lane.b32.xlu0 %v12, 78
  %v127 = vpop.permute.xlu0 %126
  %128 = vrot.lane.b32.xlu0 %v13, 78
  %v129 = vpop.permute.xlu0 %128
  %130 = vrot.lane.b32.xlu0 %v14, 78
  %v131 = vpop.permute.xlu0 %130
  %vm132 = vcmask 637952
  %v133 = vsel %vm132, %v125, %v127
  %v134 = vsel %vm132, %v127, %v129
  %v135 = vsel %vm132, %v129, %v131
  %v139 = vld [vmem:[%s1] sm:$0xff]
  %v141 = vsel %vm102, %v139, 0
  %143 = vmatpush.msra.mxu0 0.0
  %144 = vmatpush.msra.mxu0 0.0
  %145 = vmatpush.msra.mxu0 0.0
  %146 = vmatpush.msra.mxu0 0.0
  %147 = vmatpush.msra.mxu0 0.0
  %148 = vmatpush.msra.mxu0 0.0
  %149 = vmatpush.msra.mxu0 1.0
  %150 = vmatpush.msra.mxu0 %v133
  %151 = vmatpush.msra.mxu0 %v118
  %152 = vmatpush.msra.mxu0 %v103
  %153 = vmatpush.msra.mxu0 %v88
  %154 = vmatpush.msra.mxu0 %v73
  %155 = vmatpush.msra.mxu0 %v58
  %156 = vmatpush.msra.mxu0 %v43
  %157 = vmatpush.msra.mxu0 %v28
  %158 = vmatpush.msra.mxu0 %v11
  %159 = vmatmul.f32.gmra.mxu0 %v141
  %v160 = vpop.f32.mrf.mxu0
  %v161 = vadd.f32 0.0, %v160
  %162 = vdwg.mxu0
  %163 = vmatpush.msra.mxu0 0.0
  %164 = vmatpush.msra.mxu0 0.0
  %165 = vmatpush.msra.mxu0 0.0
  %166 = vmatpush.msra.mxu0 0.0
  %167 = vmatpush.msra.mxu0 0.0
  %168 = vmatpush.msra.mxu0 0.0
  %169 = vmatpush.msra.mxu0 1.0
  %170 = vmatpush.msra.mxu0 %v134
  %171 = vmatpush.msra.mxu0 %v119
  %172 = vmatpush.msra.mxu0 %v104
  %173 = vmatpush.msra.mxu0 %v89
  %174 = vmatpush.msra.mxu0 %v74
  %175 = vmatpush.msra.mxu0 %v59
  %176 = vmatpush.msra.mxu0 %v44
  %177 = vmatpush.msra.mxu0 %v29
  %178 = vmatpush.msra.mxu0 %v12
  %179 = vmatmul.f32.gmra.mxu0 %v141
  %v180 = vpop.f32.mrf.mxu0
  %v181 = vadd.f32 0.0, %v180
  %182 = vdwg.mxu0
  %183 = vmatpush.msra.mxu0 0.0
  %184 = vmatpush.msra.mxu0 0.0
  %185 = vmatpush.msra.mxu0 0.0
  %186 = vmatpush.msra.mxu0 0.0
  %187 = vmatpush.msra.mxu0 0.0
  %188 = vmatpush.msra.mxu0 0.0
  %189 = vmatpush.msra.mxu0 1.0
  %190 = vmatpush.msra.mxu0 %v135
  %191 = vmatpush.msra.mxu0 %v120
  %192 = vmatpush.msra.mxu0 %v105
  %193 = vmatpush.msra.mxu0 %v90
  %194 = vmatpush.msra.mxu0 %v75
  %195 = vmatpush.msra.mxu0 %v60
  %196 = vmatpush.msra.mxu0 %v45
  %197 = vmatpush.msra.mxu0 %v30
  %198 = vmatpush.msra.mxu0 %v13
  %199 = vmatmul.f32.gmra.mxu0 %v141
  %v200 = vpop.f32.mrf.mxu0
  %v201 = vadd.f32 0.0, %v200
  %202 = vdwg.mxu0
  %203 = vst [vmem:[%s2] sm:$0xff] %v161
  %204 = vst [vmem:[%s2 + $0x8] sm:$0xff] %v181
  %205 = vst [vmem:[%s2 + $0x10] sm:$0xff] %v201
  // Predicated region
  $region10: #{mixed_operation.1} parent=0 // pred_check
    _
  $region11: #{mixed_operation.1} parent=0 // pred_check_branch
    %207 = sbr.rel (0) target = $region13
  $region12: #{mixed_operation.1} parent=0 // pred_region
    _
  $region13: #{mixed_operation.1} parent=0 // pred_fallthru
    _
  // Predicated region
  $region14: #{mixed_operation.1} parent=0 // pred_check
    _
  $region15: #{mixed_operation.1} parent=0 // pred_check_branch
    %209 = sbr.rel (0) target = $region17
  $region16: #{mixed_operation.1} parent=0 // pred_region
    _
  $region17: #{mixed_operation.1} parent=0 // pred_fallthru
    _

</llo_original>
